<compile_context>
chip_gen: v7x
topology: tpu7x:2x2x1
jax: 0.10.0
libtpu: 0.0.40
codegen_flags: <defaults>
</compile_context>

<pallas_src>
import jax
import jax.numpy as jnp
from jax.experimental import pallas as pl
from jax.experimental.pallas import tpu as pltpu


def enc_kernel(x_ref, w1_ref, b1_ref, w2_ref, b2_ref,
               w3mu_ref, b3mu_ref, w3sig_ref, b3sig_ref,
               mu_ref, sigma_ref):
    compute_dtype = w1_ref.dtype
    x = x_ref[...]                                           # (TB, in_dim)

    # Linear 1 + ReLU (accumulate in f32, epilogue in f32).
    h1 = jnp.dot(x, w1_ref[...], preferred_element_type=jnp.float32)
    h1 = jnp.maximum(h1 + b1_ref[...], 0.0)                  # (TB, hidden*2) f32
    h1 = h1.astype(compute_dtype)

    # Linear 2 + ReLU.
    h2 = jnp.dot(h1, w2_ref[...], preferred_element_type=jnp.float32)
    h2 = jnp.maximum(h2 + b2_ref[...], 0.0)                  # (TB, hidden) f32
    h2 = h2.astype(compute_dtype)

    # Output head, split into mu / sigma halves (no intra-vreg lane slicing).
    mu = jnp.dot(h2, w3mu_ref[...], preferred_element_type=jnp.float32)
    mu = mu + b3mu_ref[...]
    sig = jnp.dot(h2, w3sig_ref[...], preferred_element_type=jnp.float32)
    sig = sig + b3sig_ref[...]

    mu_ref[...] = mu.astype(mu_ref.dtype)
    # softplus(x) = log(1 + exp(x)); logaddexp(x, 0) is the numerically stable
    # form and matches PyTorch's threshold=20 variant to f32 precision.
    sigma_ref[...] = (1e-6 + jnp.logaddexp(sig, 0.0)).astype(sigma_ref.dtype)


def _pick_tile_b(batch, max_tile_b):
    """Whole batch in one step when it fits; otherwise largest clean divisor."""
    if batch <= max_tile_b:
        return batch
    for t in (256, 128, 64, 32, 16, 8):
        if t <= max_tile_b and batch % t == 0:
            return t
    return batch  # fall back to a single step over the full batch


def enc_forward(x, params, *, max_tile_b=256, compute_dtype=jnp.float32,
                single_buffer_weights=True):
    """x: (B, in_dim) float32.  params: dict of W1,b1,W2,b2,W3,b3 (W: [in,out])."""
    B, in_dim = x.shape
    w1, b1 = params["W1"], params["b1"]
    w2, b2 = params["W2"], params["b2"]
    w3, b3 = params["W3"], params["b3"]
    hidden2 = w1.shape[1]
    hidden = w2.shape[1]
    out2 = w3.shape[1]
    out_dim = out2 // 2

    tile_b = _pick_tile_b(B, max_tile_b)
    assert B % tile_b == 0
    grid = (B // tile_b,)

    # Split the output head on the host so mu / sigma come straight out of
    # their own matmuls (layout plumbing, not compute).
    w3_mu, w3_sig = w3[:, :out_dim], w3[:, out_dim:]
    b3_mu, b3_sig = b3[:out_dim], b3[out_dim:]

    # Matmul operands optionally in bf16 (MXU-native on v6e/v7x); biases and
    # the whole epilogue stay in f32 (v5e VPU/EUP have no bf16 datapath).
    xc = x.astype(compute_dtype)
    w1c = w1.astype(compute_dtype)
    w2c = w2.astype(compute_dtype)
    w3mu_c = w3_mu.astype(compute_dtype)
    w3sig_c = w3_sig.astype(compute_dtype)
    b1_2d = b1.reshape(1, hidden2).astype(jnp.float32)
    b2_2d = b2.reshape(1, hidden).astype(jnp.float32)
    b3mu_2d = b3_mu.reshape(1, out_dim).astype(jnp.float32)
    b3sig_2d = b3_sig.reshape(1, out_dim).astype(jnp.float32)

    rep2d = lambda i: (0, 0)
    w_itemsize = jnp.dtype(compute_dtype).itemsize

    # Advisory cost estimate for XLA's scheduler.
    flops = 2 * B * (in_dim * hidden2 + hidden2 * hidden + hidden * out2)
    bytes_accessed = (
        B * in_dim * w_itemsize
        + (in_dim * hidden2 + hidden2 * hidden + hidden * out2) * w_itemsize
        + (hidden2 + hidden + out2) * 4
        + 2 * B * out_dim * 4)
    cost = pl.CostEstimate(flops=flops,
                           transcendentals=2 * B * out_dim,
                           bytes_accessed=bytes_accessed)

    # Explicit VMEM budget: single-buffered weights + a few activation tiles
    # with headroom (matters on v7x's 64 MiB VMEM once hidden scales up).
    weight_bytes = ((in_dim * hidden2 + hidden2 * hidden + hidden * out2)
                    * w_itemsize + (hidden2 + hidden + out2) * 4)
    act_bytes = 4 * tile_b * max(in_dim, hidden2, hidden, out2)
    need = 2 * weight_bytes + 8 * act_bytes + 4 * tile_b * (in_dim + 2 * out_dim)
    vmem_limit = int(min(max(2 * need, 16 << 20), 64 << 20))

    def build_call(weight_pipeline_mode):
        def wspec(shape):
            if weight_pipeline_mode is None:
                return pl.BlockSpec(shape, rep2d)
            return pl.BlockSpec(shape, rep2d,
                                pipeline_mode=weight_pipeline_mode)

        grid_spec = pl.GridSpec(
            grid=grid,
            in_specs=[
                pl.BlockSpec((tile_b, in_dim), lambda i: (i, 0)),   # x tile
                wspec((in_dim, hidden2)),                           # W1
                wspec((1, hidden2)),                                # b1
                wspec((hidden2, hidden)),                           # W2
                wspec((1, hidden)),                                 # b2
                wspec((hidden, out_dim)),                           # W3_mu
                wspec((1, out_dim)),                                # b3_mu
                wspec((hidden, out_dim)),                           # W3_sig
                wspec((1, out_dim)),                                # b3_sig
            ],
            out_specs=[
                pl.BlockSpec((tile_b, out_dim), lambda i: (i, 0)),  # mu
                pl.BlockSpec((tile_b, out_dim), lambda i: (i, 0)),  # sigma
            ],
        )
        return pl.pallas_call(
            enc_kernel,
            out_shape=(
                jax.ShapeDtypeStruct((B, out_dim), jnp.float32),
                jax.ShapeDtypeStruct((B, out_dim), jnp.float32),
            ),
            grid_spec=grid_spec,
            cost_estimate=cost,
            compiler_params=pltpu.CompilerParams(
                dimension_semantics=("parallel",),
                vmem_limit_bytes=vmem_limit),
        )

    args = (xc, w1c, b1_2d, w2c, b2_2d, w3mu_c, b3mu_2d, w3sig_c, b3sig_2d)

    if single_buffer_weights:
        # Constant-index weight blocks don't need double-buffering; fall back
        # cleanly if this jax build rejects pipeline_mode on the main pipeline.
        try:
            return build_call(pl.Buffered(1))(*args)
        except Exception:
            pass
    return build_call(None)(*args)


def init_params(key, in_dim, hidden_dim, out_dim):
    """Deterministic synthetic init (uniform, like nn.Linear default scale)."""
    ks = jax.random.split(key, 6)

    def lin(kw, kb, fan_in, fan_out):
        bound = 1.0 / jnp.sqrt(fan_in)
        w = jax.random.uniform(kw, (fan_in, fan_out), jnp.float32, -bound, bound)
        b = jax.random.uniform(kb, (fan_out,), jnp.float32, -bound, bound)
        return w, b

    W1, b1 = lin(ks[0], ks[1], in_dim, hidden_dim * 2)
    W2, b2 = lin(ks[2], ks[3], hidden_dim * 2, hidden_dim)
    W3, b3 = lin(ks[4], ks[5], hidden_dim, out_dim * 2)
    return {"W1": W1, "b1": b1, "W2": W2, "b2": b2, "W3": W3, "b3": b3}


def enc_reference(x, p):
    """Pure-JAX reference of the PyTorch forward, for correctness check."""
    h1 = jnp.maximum(x @ p["W1"] + p["b1"], 0.0)
    h2 = jnp.maximum(h1 @ p["W2"] + p["b2"], 0.0)
    y = h2 @ p["W3"] + p["b3"]
    out_dim = y.shape[1] // 2
    mu = y[:, :out_dim]
    sigma = 1e-6 + jax.nn.softplus(y[:, out_dim:])
    return mu, sigma


if __name__ == "__main__":
    key = jax.random.PRNGKey(0)
    k_param, k_x = jax.random.split(key)

    batch, in_dim, hidden_dim, out_dim = 16, 32, 32, 16
    params = init_params(k_param, in_dim, hidden_dim, out_dim)
    x = jax.random.normal(k_x, (batch, in_dim), dtype=jnp.float32)

    mu_ref, sigma_ref = enc_reference(x, params)

    # f32 matmul path: single grid step over the whole batch, tight tolerance.
    mu, sigma = enc_forward(x, params)
    mu = jax.block_until_ready(mu)
    sigma = jax.block_until_ready(sigma)
    assert mu.shape == (batch, out_dim) and sigma.shape == (batch, out_dim)
    assert jnp.allclose(mu, mu_ref, atol=1e-5, rtol=1e-5)
    assert jnp.allclose(sigma, sigma_ref, atol=1e-5, rtol=1e-5)
    assert bool(jnp.all(sigma > 0.0))

    # bf16 matmul operands (v6e/v7x MXU-native), f32 accumulate + f32 epilogue.
    mu_bf, sigma_bf = enc_forward(x, params, compute_dtype=jnp.bfloat16)
    mu_bf = jax.block_until_ready(mu_bf)
    sigma_bf = jax.block_until_ready(sigma_bf)
    assert jnp.allclose(mu_bf, mu_ref, atol=5e-2, rtol=5e-2)
    assert jnp.allclose(sigma_bf, sigma_ref, atol=5e-2, rtol=5e-2)
    assert bool(jnp.all(sigma_bf > 0.0))

    print("KERNEL_OK")
</pallas_src>

<mosaic_0001>
module attributes {stable_mosaic.version = 11 : i64} {
  func.func @enc_kernel(%arg0: i32, %arg1: memref<16x32xf32, #tpu.memory_space<vmem>>, %arg2: memref<32x64xf32, #tpu.memory_space<vmem>>, %arg3: memref<1x64xf32, #tpu.memory_space<vmem>>, %arg4: memref<64x32xf32, #tpu.memory_space<vmem>>, %arg5: memref<1x32xf32, #tpu.memory_space<vmem>>, %arg6: memref<32x16xf32, #tpu.memory_space<vmem>>, %arg7: memref<1x16xf32, #tpu.memory_space<vmem>>, %arg8: memref<32x16xf32, #tpu.memory_space<vmem>>, %arg9: memref<1x16xf32, #tpu.memory_space<vmem>>, %arg10: memref<16x16xf32, #tpu.memory_space<vmem>>, %arg11: memref<16x16xf32, #tpu.memory_space<vmem>>) attributes {dimension_semantics = [#tpu.dimension_semantics<parallel>], iteration_bounds = array<i64: 1>, scalar_prefetch = 0 : i64, scratch_operands = 0 : i64, tpu.core_type = #tpu.core_type<tc>, window_params = [{transform_indices = @transform_0, window_bounds = array<i64: 16, 32>}, {pipeline_mode = #tpu.pipeline_mode<synchronous>, transform_indices = @transform_1, window_bounds = array<i64: 32, 64>}, {pipeline_mode = #tpu.pipeline_mode<synchronous>, transform_indices = @transform_2, window_bounds = array<i64: 1, 64>}, {pipeline_mode = #tpu.pipeline_mode<synchronous>, transform_indices = @transform_3, window_bounds = array<i64: 64, 32>}, {pipeline_mode = #tpu.pipeline_mode<synchronous>, transform_indices = @transform_4, window_bounds = array<i64: 1, 32>}, {pipeline_mode = #tpu.pipeline_mode<synchronous>, transform_indices = @transform_5, window_bounds = array<i64: 32, 16>}, {pipeline_mode = #tpu.pipeline_mode<synchronous>, transform_indices = @transform_6, window_bounds = array<i64: 1, 16>}, {pipeline_mode = #tpu.pipeline_mode<synchronous>, transform_indices = @transform_7, window_bounds = array<i64: 32, 16>}, {pipeline_mode = #tpu.pipeline_mode<synchronous>, transform_indices = @transform_8, window_bounds = array<i64: 1, 16>}, {transform_indices = @transform_9, window_bounds = array<i64: 16, 16>}, {transform_indices = @transform_10, window_bounds = array<i64: 16, 16>}]} {
    %c0 = arith.constant 0 : index
    %c0_0 = arith.constant 0 : index
    %0 = vector.load %arg1[%c0, %c0_0] : memref<16x32xf32, #tpu.memory_space<vmem>>, vector<16x32xf32>
    %c0_1 = arith.constant 0 : index
    %c0_2 = arith.constant 0 : index
    %1 = vector.load %arg2[%c0_1, %c0_2] : memref<32x64xf32, #tpu.memory_space<vmem>>, vector<32x64xf32>
    %cst = arith.constant dense<0.000000e+00> : vector<16x64xf32>
    %2 = tpu.matmul %0, %1, %cst {dimension_numbers = #tpu.dot_dimension_numbers<[1], [0], [0], [1], [0, 0, 1, 1], [], []>} : vector<16x32xf32>, vector<32x64xf32>, vector<16x64xf32> -> vector<16x64xf32>
    %c0_3 = arith.constant 0 : index
    %c0_4 = arith.constant 0 : index
    %3 = vector.load %arg3[%c0_3, %c0_4] : memref<1x64xf32, #tpu.memory_space<vmem>>, vector<1x64xf32>
    %4 = vector.broadcast %3 : vector<1x64xf32> to vector<16x64xf32>
    %5 = arith.addf %2, %4 : vector<16x64xf32>
    %cst_5 = arith.constant 0.000000e+00 : f32
    %6 = vector.broadcast %cst_5 : f32 to vector<16x64xf32>
    %7 = arith.maximumf %5, %6 : vector<16x64xf32>
    %c0_6 = arith.constant 0 : index
    %c0_7 = arith.constant 0 : index
    %8 = vector.load %arg4[%c0_6, %c0_7] : memref<64x32xf32, #tpu.memory_space<vmem>>, vector<64x32xf32>
    %cst_8 = arith.constant dense<0.000000e+00> : vector<16x32xf32>
    %9 = tpu.matmul %7, %8, %cst_8 {dimension_numbers = #tpu.dot_dimension_numbers<[1], [0], [0], [1], [0, 0, 1, 1], [], []>} : vector<16x64xf32>, vector<64x32xf32>, vector<16x32xf32> -> vector<16x32xf32>
    %c0_9 = arith.constant 0 : index
    %c0_10 = arith.constant 0 : index
    %10 = vector.load %arg5[%c0_9, %c0_10] : memref<1x32xf32, #tpu.memory_space<vmem>>, vector<1x32xf32>
    %11 = vector.broadcast %10 : vector<1x32xf32> to vector<16x32xf32>
    %12 = arith.addf %9, %11 : vector<16x32xf32>
    %cst_11 = arith.constant 0.000000e+00 : f32
    %13 = vector.broadcast %cst_11 : f32 to vector<16x32xf32>
    %14 = arith.maximumf %12, %13 : vector<16x32xf32>
    %c0_12 = arith.constant 0 : index
    %c0_13 = arith.constant 0 : index
    %15 = vector.load %arg6[%c0_12, %c0_13] : memref<32x16xf32, #tpu.memory_space<vmem>>, vector<32x16xf32>
    %cst_14 = arith.constant dense<0.000000e+00> : vector<16x16xf32>
    %16 = tpu.matmul %14, %15, %cst_14 {dimension_numbers = #tpu.dot_dimension_numbers<[1], [0], [0], [1], [0, 0, 1, 1], [], []>} : vector<16x32xf32>, vector<32x16xf32>, vector<16x16xf32> -> vector<16x16xf32>
    %c0_15 = arith.constant 0 : index
    %c0_16 = arith.constant 0 : index
    %17 = vector.load %arg7[%c0_15, %c0_16] : memref<1x16xf32, #tpu.memory_space<vmem>>, vector<1x16xf32>
    %18 = vector.broadcast %17 : vector<1x16xf32> to vector<16x16xf32>
    %19 = arith.addf %16, %18 : vector<16x16xf32>
    %c0_17 = arith.constant 0 : index
    %c0_18 = arith.constant 0 : index
    %20 = vector.load %arg8[%c0_17, %c0_18] : memref<32x16xf32, #tpu.memory_space<vmem>>, vector<32x16xf32>
    %cst_19 = arith.constant dense<0.000000e+00> : vector<16x16xf32>
    %21 = tpu.matmul %14, %20, %cst_19 {dimension_numbers = #tpu.dot_dimension_numbers<[1], [0], [0], [1], [0, 0, 1, 1], [], []>} : vector<16x32xf32>, vector<32x16xf32>, vector<16x16xf32> -> vector<16x16xf32>
    %c0_20 = arith.constant 0 : index
    %c0_21 = arith.constant 0 : index
    %22 = vector.load %arg9[%c0_20, %c0_21] : memref<1x16xf32, #tpu.memory_space<vmem>>, vector<1x16xf32>
    %23 = vector.broadcast %22 : vector<1x16xf32> to vector<16x16xf32>
    %24 = arith.addf %21, %23 : vector<16x16xf32>
    %c0_22 = arith.constant 0 : index
    %c0_23 = arith.constant 0 : index
    %25 = vector.load %arg10[%c0_22, %c0_23] : memref<16x16xf32, #tpu.memory_space<vmem>>, vector<16x16xf32>
    tpu.vector_store %arg10[%c0_22, %c0_23], %19 {strides = array<i32>} : memref<16x16xf32, #tpu.memory_space<vmem>>, vector<16x16xf32>,
    %cst_24 = arith.constant 0.000000e+00 : f32
    %26 = vector.broadcast %cst_24 : f32 to vector<16x16xf32>
    %27 = arith.maximumf %24, %26 : vector<16x16xf32>
    %28 = vector.broadcast %cst_24 : f32 to vector<16x16xf32>
    %29 = arith.subf %24, %28 : vector<16x16xf32>
    %30 = arith.cmpf one, %29, %29 : vector<16x16xf32>
    %31 = vector.broadcast %cst_24 : f32 to vector<16x16xf32>
    %32 = arith.addf %24, %31 : vector<16x16xf32>
    %33 = math.absf %29 : vector<16x16xf32>
    %cst_25 = arith.constant 0.000000e+00 : f32
    %34 = vector.broadcast %cst_25 : f32 to vector<16x16xf32>
    %35 = arith.subf %34, %33 : vector<16x16xf32>
    %36 = math.exp %35 : vector<16x16xf32>
    %37 = math.log1p %36 : vector<16x16xf32>
    %38 = arith.addf %27, %37 : vector<16x16xf32>
    %39 = arith.select %30, %32, %38 : vector<16x16xi1>, vector<16x16xf32>
    %cst_26 = arith.constant 9.99999997E-7 : f32
    %40 = vector.broadcast %cst_26 : f32 to vector<16x16xf32>
    %41 = arith.addf %40, %39 : vector<16x16xf32>
    %c0_27 = arith.constant 0 : index
    %c0_28 = arith.constant 0 : index
    %42 = vector.load %arg11[%c0_27, %c0_28] : memref<16x16xf32, #tpu.memory_space<vmem>>, vector<16x16xf32>
    tpu.vector_store %arg11[%c0_27, %c0_28], %41 {strides = array<i32>} : memref<16x16xf32, #tpu.memory_space<vmem>>, vector<16x16xf32>,
    return
  }
  func.func @transform_0(%arg0: i32) -> (i32, i32) {
    %c0_i32 = arith.constant 0 : i32
    %c0_i32_0 = arith.constant 0 : i32
    return %arg0, %c0_i32 : i32, i32
  }
  func.func @transform_1(%arg0: i32) -> (i32, i32) {
    %c0_i32 = arith.constant 0 : i32
    %c0_i32_0 = arith.constant 0 : i32
    %c0_i32_1 = arith.constant 0 : i32
    return %c0_i32, %c0_i32_0 : i32, i32
  }
  func.func @transform_2(%arg0: i32) -> (i32, i32) {
    %c0_i32 = arith.constant 0 : i32
    %c0_i32_0 = arith.constant 0 : i32
    %c0_i32_1 = arith.constant 0 : i32
    return %c0_i32, %c0_i32_0 : i32, i32
  }
  func.func @transform_3(%arg0: i32) -> (i32, i32) {
    %c0_i32 = arith.constant 0 : i32
    %c0_i32_0 = arith.constant 0 : i32
    %c0_i32_1 = arith.constant 0 : i32
    return %c0_i32, %c0_i32_0 : i32, i32
  }
  func.func @transform_4(%arg0: i32) -> (i32, i32) {
    %c0_i32 = arith.constant 0 : i32
    %c0_i32_0 = arith.constant 0 : i32
    %c0_i32_1 = arith.constant 0 : i32
    return %c0_i32, %c0_i32_0 : i32, i32
  }
  func.func @transform_5(%arg0: i32) -> (i32, i32) {
    %c0_i32 = arith.constant 0 : i32
    %c0_i32_0 = arith.constant 0 : i32
    %c0_i32_1 = arith.constant 0 : i32
    return %c0_i32, %c0_i32_0 : i32, i32
  }
  func.func @transform_6(%arg0: i32) -> (i32, i32) {
    %c0_i32 = arith.constant 0 : i32
    %c0_i32_0 = arith.constant 0 : i32
    %c0_i32_1 = arith.constant 0 : i32
    return %c0_i32, %c0_i32_0 : i32, i32
  }
  func.func @transform_7(%arg0: i32) -> (i32, i32) {
    %c0_i32 = arith.constant 0 : i32
    %c0_i32_0 = arith.constant 0 : i32
    %c0_i32_1 = arith.constant 0 : i32
    return %c0_i32, %c0_i32_0 : i32, i32
  }
  func.func @transform_8(%arg0: i32) -> (i32, i32) {
    %c0_i32 = arith.constant 0 : i32
    %c0_i32_0 = arith.constant 0 : i32
    %c0_i32_1 = arith.constant 0 : i32
    return %c0_i32, %c0_i32_0 : i32, i32
  }
  func.func @transform_9(%arg0: i32) -> (i32, i32) {
    %c0_i32 = arith.constant 0 : i32
    %c0_i32_0 = arith.constant 0 : i32
    return %arg0, %c0_i32 : i32, i32
  }
  func.func @transform_10(%arg0: i32) -> (i32, i32) {
    %c0_i32 = arith.constant 0 : i32
    %c0_i32_0 = arith.constant 0 : i32
    return %arg0, %c0_i32 : i32, i32
  }
}

module attributes {stable_mosaic.version = 11 : i64} {
  func.func @enc_kernel(%arg0: i32, %arg1: memref<16x32xf32, #tpu.memory_space<vmem>>, %arg2: memref<32x64xf32, #tpu.memory_space<vmem>>, %arg3: memref<1x64xf32, #tpu.memory_space<vmem>>, %arg4: memref<64x32xf32, #tpu.memory_space<vmem>>, %arg5: memref<1x32xf32, #tpu.memory_space<vmem>>, %arg6: memref<32x16xf32, #tpu.memory_space<vmem>>, %arg7: memref<1x16xf32, #tpu.memory_space<vmem>>, %arg8: memref<32x16xf32, #tpu.memory_space<vmem>>, %arg9: memref<1x16xf32, #tpu.memory_space<vmem>>, %arg10: memref<16x16xf32, #tpu.memory_space<vmem>>, %arg11: memref<16x16xf32, #tpu.memory_space<vmem>>) attributes {dimension_semantics = [#tpu.dimension_semantics<parallel>], iteration_bounds = array<i64: 1>, scalar_prefetch = 0 : i64, scratch_operands = 0 : i64, tpu.core_type = #tpu.core_type<tc>, window_params = [{transform_indices = @transform_0, window_bounds = array<i64: 16, 32>}, {pipeline_mode = #tpu.pipeline_mode<synchronous>, transform_indices = @transform_1, window_bounds = array<i64: 32, 64>}, {pipeline_mode = #tpu.pipeline_mode<synchronous>, transform_indices = @transform_2, window_bounds = array<i64: 1, 64>}, {pipeline_mode = #tpu.pipeline_mode<synchronous>, transform_indices = @transform_3, window_bounds = array<i64: 64, 32>}, {pipeline_mode = #tpu.pipeline_mode<synchronous>, transform_indices = @transform_4, window_bounds = array<i64: 1, 32>}, {pipeline_mode = #tpu.pipeline_mode<synchronous>, transform_indices = @transform_5, window_bounds = array<i64: 32, 16>}, {pipeline_mode = #tpu.pipeline_mode<synchronous>, transform_indices = @transform_6, window_bounds = array<i64: 1, 16>}, {pipeline_mode = #tpu.pipeline_mode<synchronous>, transform_indices = @transform_7, window_bounds = array<i64: 32, 16>}, {pipeline_mode = #tpu.pipeline_mode<synchronous>, transform_indices = @transform_8, window_bounds = array<i64: 1, 16>}, {transform_indices = @transform_9, window_bounds = array<i64: 16, 16>}, {transform_indices = @transform_10, window_bounds = array<i64: 16, 16>}]} {
    %c0 = arith.constant 0 : index
    %c0_0 = arith.constant 0 : index
    %0 = vector.load %arg1[%c0, %c0_0] : memref<16x32xf32, #tpu.memory_space<vmem>>, vector<16x32xf32>
    %c0_1 = arith.constant 0 : index
    %c0_2 = arith.constant 0 : index
    %1 = vector.load %arg2[%c0_1, %c0_2] : memref<32x64xf32, #tpu.memory_space<vmem>>, vector<32x64xf32>
    %cst = arith.constant dense<0.000000e+00> : vector<16x64xf32>
    %2 = tpu.matmul %0, %1, %cst {dimension_numbers = #tpu.dot_dimension_numbers<[1], [0], [0], [1], [0, 0, 1, 1], [], []>} : vector<16x32xf32>, vector<32x64xf32>, vector<16x64xf32> -> vector<16x64xf32>
    %c0_3 = arith.constant 0 : index
    %c0_4 = arith.constant 0 : index
    %3 = vector.load %arg3[%c0_3, %c0_4] : memref<1x64xf32, #tpu.memory_space<vmem>>, vector<1x64xf32>
    %4 = vector.broadcast %3 : vector<1x64xf32> to vector<16x64xf32>
    %5 = arith.addf %2, %4 : vector<16x64xf32>
    %cst_5 = arith.constant 0.000000e+00 : f32
    %6 = vector.broadcast %cst_5 : f32 to vector<16x64xf32>
    %7 = arith.maximumf %5, %6 : vector<16x64xf32>
    %c0_6 = arith.constant 0 : index
    %c0_7 = arith.constant 0 : index
    %8 = vector.load %arg4[%c0_6, %c0_7] : memref<64x32xf32, #tpu.memory_space<vmem>>, vector<64x32xf32>
    %cst_8 = arith.constant dense<0.000000e+00> : vector<16x32xf32>
    %9 = tpu.matmul %7, %8, %cst_8 {dimension_numbers = #tpu.dot_dimension_numbers<[1], [0], [0], [1], [0, 0, 1, 1], [], []>} : vector<16x64xf32>, vector<64x32xf32>, vector<16x32xf32> -> vector<16x32xf32>
    %c0_9 = arith.constant 0 : index
    %c0_10 = arith.constant 0 : index
    %10 = vector.load %arg5[%c0_9, %c0_10] : memref<1x32xf32, #tpu.memory_space<vmem>>, vector<1x32xf32>
    %11 = vector.broadcast %10 : vector<1x32xf32> to vector<16x32xf32>
    %12 = arith.addf %9, %11 : vector<16x32xf32>
    %cst_11 = arith.constant 0.000000e+00 : f32
    %13 = vector.broadcast %cst_11 : f32 to vector<16x32xf32>
    %14 = arith.maximumf %12, %13 : vector<16x32xf32>
    %c0_12 = arith.constant 0 : index
    %c0_13 = arith.constant 0 : index
    %15 = vector.load %arg6[%c0_12, %c0_13] : memref<32x16xf32, #tpu.memory_space<vmem>>, vector<32x16xf32>
    %cst_14 = arith.constant dense<0.000000e+00> : vector<16x16xf32>
    %16 = tpu.matmul %14, %15, %cst_14 {dimension_numbers = #tpu.dot_dimension_numbers<[1], [0], [0], [1], [0, 0, 1, 1], [], []>} : vector<16x32xf32>, vector<32x16xf32>, vector<16x16xf32> -> vector<16x16xf32>
    %c0_15 = arith.constant 0 : index
    %c0_16 = arith.constant 0 : index
    %17 = vector.load %arg7[%c0_15, %c0_16] : memref<1x16xf32, #tpu.memory_space<vmem>>, vector<1x16xf32>
    %18 = vector.broadcast %17 : vector<1x16xf32> to vector<16x16xf32>
    %19 = arith.addf %16, %18 : vector<16x16xf32>
    %c0_17 = arith.constant 0 : index
    %c0_18 = arith.constant 0 : index
    %20 = vector.load %arg8[%c0_17, %c0_18] : memref<32x16xf32, #tpu.memory_space<vmem>>, vector<32x16xf32>
    %cst_19 = arith.constant dense<0.000000e+00> : vector<16x16xf32>
    %21 = tpu.matmul %14, %20, %cst_19 {dimension_numbers = #tpu.dot_dimension_numbers<[1], [0], [0], [1], [0, 0, 1, 1], [], []>} : vector<16x32xf32>, vector<32x16xf32>, vector<16x16xf32> -> vector<16x16xf32>
    %c0_20 = arith.constant 0 : index
    %c0_21 = arith.constant 0 : index
    %22 = vector.load %arg9[%c0_20, %c0_21] : memref<1x16xf32, #tpu.memory_space<vmem>>, vector<1x16xf32>
    %23 = vector.broadcast %22 : vector<1x16xf32> to vector<16x16xf32>
    %24 = arith.addf %21, %23 : vector<16x16xf32>
    %c0_22 = arith.constant 0 : index
    %c0_23 = arith.constant 0 : index
    %25 = vector.load %arg10[%c0_22, %c0_23] : memref<16x16xf32, #tpu.memory_space<vmem>>, vector<16x16xf32>
    tpu.vector_store %arg10[%c0_22, %c0_23], %19 {strides = array<i32>} : memref<16x16xf32, #tpu.memory_space<vmem>>, vector<16x16xf32>,
    %cst_24 = arith.constant 0.000000e+00 : f32
    %26 = vector.broadcast %cst_24 : f32 to vector<16x16xf32>
    %27 = arith.maximumf %24, %26 : vector<16x16xf32>
    %28 = vector.broadcast %cst_24 : f32 to vector<16x16xf32>
    %29 = arith.subf %24, %28 : vector<16x16xf32>
    %30 = arith.cmpf one, %29, %29 : vector<16x16xf32>
    %31 = vector.broadcast %cst_24 : f32 to vector<16x16xf32>
    %32 = arith.addf %24, %31 : vector<16x16xf32>
    %33 = math.absf %29 : vector<16x16xf32>
    %cst_25 = arith.constant 0.000000e+00 : f32
    %34 = vector.broadcast %cst_25 : f32 to vector<16x16xf32>
    %35 = arith.subf %34, %33 : vector<16x16xf32>
    %36 = math.exp %35 : vector<16x16xf32>
    %37 = math.log1p %36 : vector<16x16xf32>
    %38 = arith.addf %27, %37 : vector<16x16xf32>
    %39 = arith.select %30, %32, %38 : vector<16x16xi1>, vector<16x16xf32>
    %cst_26 = arith.constant 9.99999997E-7 : f32
    %40 = vector.broadcast %cst_26 : f32 to vector<16x16xf32>
    %41 = arith.addf %40, %39 : vector<16x16xf32>
    %c0_27 = arith.constant 0 : index
    %c0_28 = arith.constant 0 : index
    %42 = vector.load %arg11[%c0_27, %c0_28] : memref<16x16xf32, #tpu.memory_space<vmem>>, vector<16x16xf32>
    tpu.vector_store %arg11[%c0_27, %c0_28], %41 {strides = array<i32>} : memref<16x16xf32, #tpu.memory_space<vmem>>, vector<16x16xf32>,
    return
  }
  func.func @transform_0(%arg0: i32) -> (i32, i32) {
    %c0_i32 = arith.constant 0 : i32
    %c0_i32_0 = arith.constant 0 : i32
    return %arg0, %c0_i32 : i32, i32
  }
  func.func @transform_1(%arg0: i32) -> (i32, i32) {
    %c0_i32 = arith.constant 0 : i32
    %c0_i32_0 = arith.constant 0 : i32
    %c0_i32_1 = arith.constant 0 : i32
    return %c0_i32, %c0_i32_0 : i32, i32
  }
  func.func @transform_2(%arg0: i32) -> (i32, i32) {
    %c0_i32 = arith.constant 0 : i32
    %c0_i32_0 = arith.constant 0 : i32
    %c0_i32_1 = arith.constant 0 : i32
    return %c0_i32, %c0_i32_0 : i32, i32
  }
  func.func @transform_3(%arg0: i32) -> (i32, i32) {
    %c0_i32 = arith.constant 0 : i32
    %c0_i32_0 = arith.constant 0 : i32
    %c0_i32_1 = arith.constant 0 : i32
    return %c0_i32, %c0_i32_0 : i32, i32
  }
  func.func @transform_4(%arg0: i32) -> (i32, i32) {
    %c0_i32 = arith.constant 0 : i32
    %c0_i32_0 = arith.constant 0 : i32
    %c0_i32_1 = arith.constant 0 : i32
    return %c0_i32, %c0_i32_0 : i32, i32
  }
  func.func @transform_5(%arg0: i32) -> (i32, i32) {
    %c0_i32 = arith.constant 0 : i32
    %c0_i32_0 = arith.constant 0 : i32
    %c0_i32_1 = arith.constant 0 : i32
    return %c0_i32, %c0_i32_0 : i32, i32
  }
  func.func @transform_6(%arg0: i32) -> (i32, i32) {
    %c0_i32 = arith.constant 0 : i32
    %c0_i32_0 = arith.constant 0 : i32
    %c0_i32_1 = arith.constant 0 : i32
    return %c0_i32, %c0_i32_0 : i32, i32
  }
  func.func @transform_7(%arg0: i32) -> (i32, i32) {
    %c0_i32 = arith.constant 0 : i32
    %c0_i32_0 = arith.constant 0 : i32
    %c0_i32_1 = arith.constant 0 : i32
    return %c0_i32, %c0_i32_0 : i32, i32
  }
  func.func @transform_8(%arg0: i32) -> (i32, i32) {
    %c0_i32 = arith.constant 0 : i32
    %c0_i32_0 = arith.constant 0 : i32
    %c0_i32_1 = arith.constant 0 : i32
    return %c0_i32, %c0_i32_0 : i32, i32
  }
  func.func @transform_9(%arg0: i32) -> (i32, i32) {
    %c0_i32 = arith.constant 0 : i32
    %c0_i32_0 = arith.constant 0 : i32
    return %arg0, %c0_i32 : i32, i32
  }
  func.func @transform_10(%arg0: i32) -> (i32, i32) {
    %c0_i32 = arith.constant 0 : i32
    %c0_i32_0 = arith.constant 0 : i32
    return %arg0, %c0_i32 : i32, i32
  }
}

</mosaic_0001>

<llo_original>
// kernel: tpu_custom_call.1
$region0: #{tpu_custom_call.1}
  #allocation0 [shape = 'u32[]', space=smem, size = 0x4, offset = 0x4, fixed_abs, tag = 'smem constant byte address 0x4 - core index']
  #allocation1 [shape = 'u32[144,128]{1,0:T(1,128)}', space=vmem, size = 0x12000, scoped, tag = 'internal scratch']
  %s0 = inlined_call_operand.vmem [shape: f32[16,32], index: 0, kind: input, shape index: {}]
  %s1 = inlined_call_operand.vmem [shape: f32[32,64], index: 1, kind: input, shape index: {}]
  %s2 = inlined_call_operand.vmem [shape: f32[1,64], index: 2, kind: input, shape index: {}]
  %s3 = inlined_call_operand.vmem [shape: f32[64,32], index: 3, kind: input, shape index: {}]
  %s4 = inlined_call_operand.vmem [shape: f32[1,32], index: 4, kind: input, shape index: {}]
  %s5 = inlined_call_operand.vmem [shape: f32[32,16], index: 5, kind: input, shape index: {}]
  %s6 = inlined_call_operand.vmem [shape: f32[1,16], index: 6, kind: input, shape index: {}]
  %s7 = inlined_call_operand.vmem [shape: f32[32,16], index: 7, kind: input, shape index: {}]
  %s8 = inlined_call_operand.vmem [shape: f32[1,16], index: 8, kind: input, shape index: {}]
  %s9 = inlined_call_operand.hbm [shape: f32[16,16], index: 9, kind: output, shape index: {0}]
  %s10 = inlined_call_operand.hbm [shape: f32[16,16], index: 10, kind: output, shape index: {1}]
  %11 = xla_tuple %s9, %s10
  %s12 = sld [smem:[#allocation0]]
  $region54: #{tpu_custom_call.1} parent=0
    _
  %s14 = ssub.s32 1, %s12
  %s15 = scalar_select 0, %s14, %s12
  $region1: #{tpu_custom_call.1} parent=0
    #allocation2 [shape = 'u8[8192]{0}', space=vmem, size = 0x2000, scoped, tag = 'output window, operand 0, single buffered']
    #allocation3 [shape = 's32[1]{0}', space=sflag, size = 0x4, scoped, tag = 'scoped memory for tpu_custom_call.1']
    #allocation4 [shape = 'u8[8192]{0}', space=vmem, size = 0x2000, scoped, tag = 'output window, operand 1, single buffered']
    #allocation5 [shape = 's32[1]{0}', space=sflag, size = 0x4, scoped, tag = 'scoped memory for tpu_custom_call.1']
    %16 = vsyncpa [#allocation3], 0
    %17 = vsyncpa [#allocation5], 0
    // Predicated region
    $region2: #{tpu_custom_call.1} parent=1 // pred_check
      _
    $region3: #{tpu_custom_call.1} parent=1 // pred_check_branch
      %19 = sbr.rel (0) target = $region5
    $region4: #{tpu_custom_call.1} parent=1 // pred_region
      _
    $region5: #{tpu_custom_call.1} parent=1 // pred_fallthru
      _
    // Predicated region
    $region6: #{tpu_custom_call.1} parent=1 // pred_check
      _
    $region7: #{tpu_custom_call.1} parent=1 // pred_check_branch
      %21 = sbr.rel (0) target = $region9
    $region8: #{tpu_custom_call.1} parent=1 // pred_region
      _
    $region9: #{tpu_custom_call.1} parent=1 // pred_fallthru
      _
    // Predicated region
    $region10: #{tpu_custom_call.1} parent=1 // pred_check
      _
    $region11: #{tpu_custom_call.1} parent=1 // pred_check_branch
      %23 = sbr.rel (0) target = $region13
    $region12: #{tpu_custom_call.1} parent=1 // pred_region
      _
    $region13: #{tpu_custom_call.1} parent=1 // pred_fallthru
      _
    // Predicated region
    $region14: #{tpu_custom_call.1} parent=1 // pred_check
      _
    $region15: #{tpu_custom_call.1} parent=1 // pred_check_branch
      %25 = sbr.rel (0) target = $region17
    $region16: #{tpu_custom_call.1} parent=1 // pred_region
      _
    $region17: #{tpu_custom_call.1} parent=1 // pred_fallthru
      _
    // Predicated region
    $region18: #{tpu_custom_call.1} parent=1 // pred_check
      _
    $region19: #{tpu_custom_call.1} parent=1 // pred_check_branch
      %27 = sbr.rel (0) target = $region21
    $region20: #{tpu_custom_call.1} parent=1 // pred_region
      _
    $region21: #{tpu_custom_call.1} parent=1 // pred_fallthru
      _
    // Predicated region
    $region22: #{tpu_custom_call.1} parent=1 // pred_check
      _
    $region23: #{tpu_custom_call.1} parent=1 // pred_check_branch
      %29 = sbr.rel (0) target = $region25
    $region24: #{tpu_custom_call.1} parent=1 // pred_region
      _
    $region25: #{tpu_custom_call.1} parent=1 // pred_fallthru
      _
    // Predicated region
    $region26: #{tpu_custom_call.1} parent=1 // pred_check
      _
    $region27: #{tpu_custom_call.1} parent=1 // pred_check_branch
      %31 = sbr.rel (0) target = $region29
    $region28: #{tpu_custom_call.1} parent=1 // pred_region
      _
    $region29: #{tpu_custom_call.1} parent=1 // pred_fallthru
      _
    // Predicated region
    $region30: #{tpu_custom_call.1} parent=1 // pred_check
      _
    $region31: #{tpu_custom_call.1} parent=1 // pred_check_branch
      %33 = sbr.rel (0) target = $region33
    $region32: #{tpu_custom_call.1} parent=1 // pred_region
      _
    $region33: #{tpu_custom_call.1} parent=1 // pred_fallthru
      _
    // Predicated region
    $region34: #{tpu_custom_call.1} parent=1 // pred_check
      _
    $region35: #{tpu_custom_call.1} parent=1 // pred_check_branch
      %35 = sbr.rel (0) target = $region37
    $region36: #{tpu_custom_call.1} parent=1 // pred_region
      _
    $region37: #{tpu_custom_call.1} parent=1 // pred_fallthru
      _
    %v36 = vld [vmem:[%s0] sm:$0xff]
    %v37 = vld [vmem:[%s0 + $0x8] sm:$0xff]
    %v38 = vld [vmem:[%s1] sm:$0xff]
    %v39 = vld [vmem:[%s1 + $0x8] sm:$0xff]
    %v40 = vld [vmem:[%s1 + $0x10] sm:$0xff]
    %v41 = vld [vmem:[%s1 + $0x18] sm:$0xff]
    %v42 = vld [vmem:[%s2] sm:$0x1]
    %v44 = vlaneseq
    %v45 = vshrl.u32 %v44, 7
    %v46 = vsub.s32 0, %v45
    %v47 = vrot.slane %v42, %v46
    %vm49 = vcmask 261120
    %v51 = vsel %vm49, %v36, 0
    %v54 = vsel %vm49, %v37, 0
    %56 = vmatprep.subr.mxu0 0.0
    %57 = vmatpush1.msra.mxu0 %v38
    %58 = vmatprep.subr.mxu0 0.0
    %59 = vmatpush1.msra.mxu0 %v39
    %60 = vmatprep.subr.mxu0 0.0
    %61 = vmatpush1.msra.mxu0 %v40
    %62 = vmatprep.subr.mxu0 0.0
    %63 = vmatpush1.msra.mxu0 %v41
    %64 = vmatprep.subr.mxu0 0.0
    %65 = vmatpush1.msra.mxu0 0.0
    %66 = vmatprep.subr.mxu0 0.0
    %67 = vmatpush1.msra.mxu0 0.0
    %68 = vmatprep.subr.mxu0 0.0
    %69 = vmatpush1.msra.mxu0 0.0
    %70 = vmatprep.subr.mxu0 0.0
    %71 = vmatpush1.msra.mxu0 0.0
    %72 = vmatprep.subr.mxu0 0.0
    %73 = vmatpush1.msra.mxu0 0.0
    %74 = vmatprep.subr.mxu0 0.0
    %75 = vmatpush1.msra.mxu0 0.0
    %76 = vmatprep.subr.mxu0 0.0
    %77 = vmatpush1.msra.mxu0 0.0
    %78 = vmatprep.subr.mxu0 0.0
    %79 = vmatpush1.msra.mxu0 0.0
    %80 = vmatprep.subr.mxu0 0.0
    %81 = vmatpush1.msra.mxu0 0.0
    %82 = vmatprep.subr.mxu0 0.0
    %83 = vmatpush1.msra.mxu0 0.0
    %84 = vmatprep.subr.mxu0 0.0
    %85 = vmatpush1.msra.mxu0 0.0
    %86 = vmatprep.subr.mxu0 0.0
    %87 = vmatpush1.msra.mxu0 0.0
    %88 = vmatprep.subr.mxu0 0.0
    %89 = vmatpush1.msra.mxu0 0.0
    %90 = vmatprep.subr.mxu0 0.0
    %91 = vmatpush1.msra.mxu0 0.0
    %92 = vmatprep.subr.mxu0 0.0
    %93 = vmatpush1.msra.mxu0 0.0
    %94 = vmatprep.subr.mxu0 0.0
    %95 = vmatpush1.msra.mxu0 0.0
    %96 = vmatprep.subr.mxu0 0.0
    %97 = vmatpush1.msra.mxu0 0.0
    %98 = vmatprep.subr.mxu0 0.0
    %99 = vmatpush1.msra.mxu0 0.0
    %100 = vmatprep.subr.mxu0 0.0
    %101 = vmatpush1.msra.mxu0 0.0
    %102 = vmatprep.subr.mxu0 0.0
    %103 = vmatpush1.msra.mxu0 0.0
    %104 = vmatprep.subr.mxu0 0.0
    %105 = vmatpush1.msra.mxu0 0.0
    %106 = vmatprep.subr.mxu0 0.0
    %107 = vmatpush1.msra.mxu0 0.0
    %108 = vmatprep.subr.mxu0 0.0
    %109 = vmatpush1.msra.mxu0 0.0
    %110 = vmatprep.subr.mxu0 0.0
    %111 = vmatpush1.msra.mxu0 0.0
    %112 = vmatprep.subr.mxu0 0.0
    %113 = vmatpush1.msra.mxu0 0.0
    %114 = vmatprep.subr.mxu0 0.0
    %115 = vmatpush1.msra.mxu0 0.0
    %116 = vmatprep.subr.mxu0 0.0
    %117 = vmatpush1.msra.mxu0 0.0
    %118 = vmatprep.subr.mxu0 0.0
    %119 = vmatpush1.msra.mxu0 0.0
    %120 = vmatprep.mubr.f32.mxu0 0.0
    %121 = vmatmul.mubr.f32.gmra.mrb[0].mxu0 %v51
    %v122 = vpop.f32.mrb[0].mxu0
    %v123 = vadd.f32 %v47, %v122
    %v124 = vpop.f32.mrb[0].mxu0
    %125 = vmatprep.mubr.f32.mxu0 0.0
    %126 = vmatmul.mubr.f32.gmra.mrb[0].mxu0 %v54
    %v127 = vpop.f32.mrb[0].mxu0
    %v128 = vadd.f32 %v47, %v127
    %v129 = vpop.f32.mrb[0].mxu0
    %130 = vdwg.mxu0
    %v131 = vmax.f32 %v123, 0.0
    %v132 = vmax.f32 %v128, 0.0
    %v133 = vld [vmem:[%s3] sm:$0xff]
    %v134 = vld [vmem:[%s3 + $0x8] sm:$0xff]
    %v135 = vld [vmem:[%s3 + $0x10] sm:$0xff]
    %v136 = vld [vmem:[%s3 + $0x18] sm:$0xff]
    %v137 = vld [vmem:[%s3 + $0x20] sm:$0xff]
    %v138 = vld [vmem:[%s3 + $0x28] sm:$0xff]
    %v139 = vld [vmem:[%s3 + $0x30] sm:$0xff]
    %v140 = vld [vmem:[%s3 + $0x38] sm:$0xff]
    %v141 = vld [vmem:[%s4] sm:$0x1]
    %v143 = vlaneseq
    %v144 = vshrl.u32 %v143, 7
    %v145 = vsub.s32 0, %v144
    %v146 = vrot.slane %v141, %v145
    %vm148 = vcmask 523264
    %v150 = vsel %vm148, %v131, 0
    %v153 = vsel %vm148, %v132, 0
    %155 = vmatprep.subr.mxu0 0.0
    %156 = vmatpush1.msra.mxu0 %v133
    %157 = vmatprep.subr.mxu0 0.0
    %158 = vmatpush1.msra.mxu0 %v134
    %159 = vmatprep.subr.mxu0 0.0
    %160 = vmatpush1.msra.mxu0 %v135
    %161 = vmatprep.subr.mxu0 0.0
    %162 = vmatpush1.msra.mxu0 %v136
    %163 = vmatprep.subr.mxu0 0.0
    %164 = vmatpush1.msra.mxu0 %v137
    %165 = vmatprep.subr.mxu0 0.0
    %166 = vmatpush1.msra.mxu0 %v138
    %167 = vmatprep.subr.mxu0 0.0
    %168 = vmatpush1.msra.mxu0 %v139
    %169 = vmatprep.subr.mxu0 0.0
    %170 = vmatpush1.msra.mxu0 %v140
    %171 = vmatprep.subr.mxu0 0.0
    %172 = vmatpush1.msra.mxu0 0.0
    %173 = vmatprep.subr.mxu0 0.0
    %174 = vmatpush1.msra.mxu0 0.0
    %175 = vmatprep.subr.mxu0 0.0
    %176 = vmatpush1.msra.mxu0 0.0
    %177 = vmatprep.subr.mxu0 0.0
    %178 = vmatpush1.msra.mxu0 0.0
    %179 = vmatprep.subr.mxu0 0.0
    %180 = vmatpush1.msra.mxu0 0.0
    %181 = vmatprep.subr.mxu0 0.0
    %182 = vmatpush1.msra.mxu0 0.0
    %183 = vmatprep.subr.mxu0 0.0
    %184 = vmatpush1.msra.mxu0 0.0
    %185 = vmatprep.subr.mxu0 0.0
    %186 = vmatpush1.msra.mxu0 0.0
    %187 = vmatprep.subr.mxu0 0.0
    %188 = vmatpush1.msra.mxu0 0.0
    %189 = vmatprep.subr.mxu0 0.0
    %190 = vmatpush1.msra.mxu0 0.0
    %191 = vmatprep.subr.mxu0 0.0
    %192 = vmatpush1.msra.mxu0 0.0
    %193 = vmatprep.subr.mxu0 0.0
    %194 = vmatpush1.msra.mxu0 0.0
    %195 = vmatprep.subr.mxu0 0.0
    %196 = vmatpush1.msra.mxu0 0.0
    %197 = vmatprep.subr.mxu0 0.0
    %198 = vmatpush1.msra.mxu0 0.0
    %199 = vmatprep.subr.mxu0 0.0
    %200 = vmatpush1.msra.mxu0 0.0
    %201 = vmatprep.subr.mxu0 0.0
    %202 = vmatpush1.msra.mxu0 0.0
    %203 = vmatprep.subr.mxu0 0.0
    %204 = vmatpush1.msra.mxu0 0.0
    %205 = vmatprep.subr.mxu0 0.0
    %206 = vmatpush1.msra.mxu0 0.0
    %207 = vmatprep.subr.mxu0 0.0
    %208 = vmatpush1.msra.mxu0 0.0
    %209 = vmatprep.subr.mxu0 0.0
    %210 = vmatpush1.msra.mxu0 0.0
    %211 = vmatprep.subr.mxu0 0.0
    %212 = vmatpush1.msra.mxu0 0.0
    %213 = vmatprep.subr.mxu0 0.0
    %214 = vmatpush1.msra.mxu0 0.0
    %215 = vmatprep.subr.mxu0 0.0
    %216 = vmatpush1.msra.mxu0 0.0
    %217 = vmatprep.subr.mxu0 0.0
    %218 = vmatpush1.msra.mxu0 0.0
    %219 = vmatprep.mubr.f32.mxu0 0.0
    %220 = vmatmul.mubr.f32.gmra.mrb[0].mxu0 %v150
    %v221 = vpop.f32.mrb[0].mxu0
    %v222 = vadd.f32 %v146, %v221
    %v223 = vpop.f32.mrb[0].mxu0
    %224 = vmatprep.mubr.f32.mxu0 0.0
    %225 = vmatmul.mubr.f32.gmra.mrb[0].mxu0 %v153
    %v226 = vpop.f32.mrb[0].mxu0
    %v227 = vadd.f32 %v146, %v226
    %v228 = vpop.f32.mrb[0].mxu0
    %229 = vdwg.mxu0
    %v230 = vmax.f32 %v222, 0.0
    %v231 = vmax.f32 %v227, 0.0
    %v232 = vld [vmem:[%s5] sm:$0xff]
    %v233 = vld [vmem:[%s5 + $0x8] sm:$0xff]
    %v234 = vld [vmem:[%s5 + $0x10] sm:$0xff]
    %v235 = vld [vmem:[%s5 + $0x18] sm:$0xff]
    %v236 = vld [vmem:[%s6] sm:$0x1]
    %v238 = vlaneseq
    %v239 = vshrl.u32 %v238, 7
    %v240 = vsub.s32 0, %v239
    %v241 = vrot.slane %v236, %v240
    %v244 = vsel %vm49, %v230, 0
    %v247 = vsel %vm49, %v231, 0
    %249 = vmatprep.subr.mxu0 0.0
    %250 = vmatpush1.msra.mxu0 %v232
    %251 = vmatprep.subr.mxu0 0.0
    %252 = vmatpush1.msra.mxu0 %v233
    %253 = vmatprep.subr.mxu0 0.0
    %254 = vmatpush1.msra.mxu0 %v234
    %255 = vmatprep.subr.mxu0 0.0
    %256 = vmatpush1.msra.mxu0 %v235
    %257 = vmatprep.subr.mxu0 0.0
    %258 = vmatpush1.msra.mxu0 0.0
    %259 = vmatprep.subr.mxu0 0.0
    %260 = vmatpush1.msra.mxu0 0.0
    %261 = vmatprep.subr.mxu0 0.0
    %262 = vmatpush1.msra.mxu0 0.0
    %263 = vmatprep.subr.mxu0 0.0
    %264 = vmatpush1.msra.mxu0 0.0
    %265 = vmatprep.subr.mxu0 0.0
    %266 = vmatpush1.msra.mxu0 0.0
    %267 = vmatprep.subr.mxu0 0.0
    %268 = vmatpush1.msra.mxu0 0.0
    %269 = vmatprep.subr.mxu0 0.0
    %270 = vmatpush1.msra.mxu0 0.0
    %271 = vmatprep.subr.mxu0 0.0
    %272 = vmatpush1.msra.mxu0 0.0
    %273 = vmatprep.subr.mxu0 0.0
    %274 = vmatpush1.msra.mxu0 0.0
    %275 = vmatprep.subr.mxu0 0.0
    %276 = vmatpush1.msra.mxu0 0.0
    %277 = vmatprep.subr.mxu0 0.0
    %278 = vmatpush1.msra.mxu0 0.0
    %279 = vmatprep.subr.mxu0 0.0
    %280 = vmatpush1.msra.mxu0 0.0
    %281 = vmatprep.subr.mxu0 0.0
    %282 = vmatpush1.msra.mxu0 0.0
    %283 = vmatprep.subr.mxu0 0.0
    %284 = vmatpush1.msra.mxu0 0.0
    %285 = vmatprep.subr.mxu0 0.0
    %286 = vmatpush1.msra.mxu0 0.0
    %287 = vmatprep.subr.mxu0 0.0
    %288 = vmatpush1.msra.mxu0 0.0
    %289 = vmatprep.subr.mxu0 0.0
    %290 = vmatpush1.msra.mxu0 0.0
    %291 = vmatprep.subr.mxu0 0.0
    %292 = vmatpush1.msra.mxu0 0.0
    %293 = vmatprep.subr.mxu0 0.0
    %294 = vmatpush1.msra.mxu0 0.0
    %295 = vmatprep.subr.mxu0 0.0
    %296 = vmatpush1.msra.mxu0 0.0
    %297 = vmatprep.subr.mxu0 0.0
    %298 = vmatpush1.msra.mxu0 0.0
    %299 = vmatprep.subr.mxu0 0.0
    %300 = vmatpush1.msra.mxu0 0.0
    %301 = vmatprep.subr.mxu0 0.0
    %302 = vmatpush1.msra.mxu0 0.0
    %303 = vmatprep.subr.mxu0 0.0
    %304 = vmatpush1.msra.mxu0 0.0
    %305 = vmatprep.subr.mxu0 0.0
    %306 = vmatpush1.msra.mxu0 0.0
    %307 = vmatprep.subr.mxu0 0.0
    %308 = vmatpush1.msra.mxu0 0.0
    %309 = vmatprep.subr.mxu0 0.0
    %310 = vmatpush1.msra.mxu0 0.0
    %311 = vmatprep.subr.mxu0 0.0
    %312 = vmatpush1.msra.mxu0 0.0
    %313 = vmatprep.mubr.f32.mxu0 0.0
    %314 = vmatmul.mubr.f32.gmra.mrb[0].mxu0 %v244
    %v315 = vpop.f32.mrb[0].mxu0
    %v316 = vadd.f32 %v241, %v315
    %v317 = vpop.f32.mrb[0].mxu0
    %318 = vmatprep.mubr.f32.mxu0 0.0
    %319 = vmatmul.mubr.f32.gmra.mrb[0].mxu0 %v247
    %v320 = vpop.f32.mrb[0].mxu0
    %v321 = vadd.f32 %v241, %v320
    %v322 = vpop.f32.mrb[0].mxu0
    %323 = vdwg.mxu0
    %v324 = vld [vmem:[%s7] sm:$0xff]
    %v325 = vld [vmem:[%s7 + $0x8] sm:$0xff]
    %v326 = vld [vmem:[%s7 + $0x10] sm:$0xff]
    %v327 = vld [vmem:[%s7 + $0x18] sm:$0xff]
    %v328 = vld [vmem:[%s8] sm:$0x1]
    %v330 = vlaneseq
    %v331 = vshrl.u32 %v330, 7
    %v332 = vsub.s32 0, %v331
    %v333 = vrot.slane %v328, %v332
    %335 = vmatprep.subr.mxu0 0.0
    %336 = vmatpush1.msra.mxu0 %v324
    %337 = vmatprep.subr.mxu0 0.0
    %338 = vmatpush1.msra.mxu0 %v325
    %339 = vmatprep.subr.mxu0 0.0
    %340 = vmatpush1.msra.mxu0 %v326
    %341 = vmatprep.subr.mxu0 0.0
    %342 = vmatpush1.msra.mxu0 %v327
    %343 = vmatprep.subr.mxu0 0.0
    %344 = vmatpush1.msra.mxu0 0.0
    %345 = vmatprep.subr.mxu0 0.0
    %346 = vmatpush1.msra.mxu0 0.0
    %347 = vmatprep.subr.mxu0 0.0
    %348 = vmatpush1.msra.mxu0 0.0
    %349 = vmatprep.subr.mxu0 0.0
    %350 = vmatpush1.msra.mxu0 0.0
    %351 = vmatprep.subr.mxu0 0.0
    %352 = vmatpush1.msra.mxu0 0.0
    %353 = vmatprep.subr.mxu0 0.0
    %354 = vmatpush1.msra.mxu0 0.0
    %355 = vmatprep.subr.mxu0 0.0
    %356 = vmatpush1.msra.mxu0 0.0
    %357 = vmatprep.subr.mxu0 0.0
    %358 = vmatpush1.msra.mxu0 0.0
    %359 = vmatprep.subr.mxu0 0.0
    %360 = vmatpush1.msra.mxu0 0.0
    %361 = vmatprep.subr.mxu0 0.0
    %362 = vmatpush1.msra.mxu0 0.0
    %363 = vmatprep.subr.mxu0 0.0
    %364 = vmatpush1.msra.mxu0 0.0
    %365 = vmatprep.subr.mxu0 0.0
    %366 = vmatpush1.msra.mxu0 0.0
    %367 = vmatprep.subr.mxu0 0.0
    %368 = vmatpush1.msra.mxu0 0.0
    %369 = vmatprep.subr.mxu0 0.0
    %370 = vmatpush1.msra.mxu0 0.0
    %371 = vmatprep.subr.mxu0 0.0
    %372 = vmatpush1.msra.mxu0 0.0
    %373 = vmatprep.subr.mxu0 0.0
    %374 = vmatpush1.msra.mxu0 0.0
    %375 = vmatprep.subr.mxu0 0.0
    %376 = vmatpush1.msra.mxu0 0.0
    %377 = vmatprep.subr.mxu0 0.0
    %378 = vmatpush1.msra.mxu0 0.0
    %379 = vmatprep.subr.mxu0 0.0
    %380 = vmatpush1.msra.mxu0 0.0
    %381 = vmatprep.subr.mxu0 0.0
    %382 = vmatpush1.msra.mxu0 0.0
    %383 = vmatprep.subr.mxu0 0.0
    %384 = vmatpush1.msra.mxu0 0.0
    %385 = vmatprep.subr.mxu0 0.0
    %386 = vmatpush1.msra.mxu0 0.0
    %387 = vmatprep.subr.mxu0 0.0
    %388 = vmatpush1.msra.mxu0 0.0
    %389 = vmatprep.subr.mxu0 0.0
    %390 = vmatpush1.msra.mxu0 0.0
    %391 = vmatprep.subr.mxu0 0.0
    %392 = vmatpush1.msra.mxu0 0.0
    %393 = vmatprep.subr.mxu0 0.0
    %394 = vmatpush1.msra.mxu0 0.0
    %395 = vmatprep.subr.mxu0 0.0
    %396 = vmatpush1.msra.mxu0 0.0
    %397 = vmatprep.subr.mxu0 0.0
    %398 = vmatpush1.msra.mxu0 0.0
    %399 = vmatprep.mubr.f32.mxu0 0.0
    %400 = vmatmul.mubr.f32.gmra.mrb[0].mxu0 %v244
    %v401 = vpop.f32.mrb[0].mxu0
    %v402 = vadd.f32 %v333, %v401
    %v403 = vpop.f32.mrb[0].mxu0
    %404 = vmatprep.mubr.f32.mxu0 0.0
    %405 = vmatmul.mubr.f32.gmra.mrb[0].mxu0 %v247
    %v406 = vpop.f32.mrb[0].mxu0
    %v407 = vadd.f32 %v333, %v406
    %v408 = vpop.f32.mrb[0].mxu0
    %409 = vdwg.mxu0
    %vm410 = vcmask 130048
    %411 = vst.msk [vmem:[#allocation2] sm:$0xff] %vm410, %v316
    %412 = vst.msk [vmem:[#allocation2 + $0x8] sm:$0xff] %vm410, %v321
    %v413 = vmax.f32 %v402, 0.0
    %v414 = vmax.f32 %v407, 0.0
    %vm415 = vcmp.ne.f32.partialorder %v402, %v402
    %vm416 = vcmp.ne.f32.partialorder %v407, %v407
    %v417 = vadd.f32 %v402, 0.0
    %v418 = vadd.f32 %v407, 0.0
    %v419 = vand.u32 2147483647, %v402
    %v420 = vand.u32 2147483647, %v407
    %v421 = vsub.f32 0.0, %v419
    %v422 = vsub.f32 0.0, %v420
    %v423 = vmul.f32 %v421, 1.442695
    %v424 = vpow.pop %v423
    %v425 = vmul.f32 %v422, 1.442695
    %v426 = vpow.pop %v425
    %v427 = vadd.f32 %v424, 1.0
    %v428 = vlog2.pop %v427
    %v429 = vmul.f32 %v428, 0.6931472
    %v430 = vmul.f32 -0.5, %v424
    %v431 = vadd.f32 %v430, 1.0
    %v432 = vmul.f32 %v431, %v424
    %v433 = vand.u32 2147483647, %v424
    %vm434 = vcmp.lt.f32.partialorder %v433, 0.0004427343
    %v435 = vsel %vm434, %v432, %v429
    %v436 = vadd.f32 %v426, 1.0
    %v437 = vlog2.pop %v436
    %v438 = vmul.f32 %v437, 0.6931472
    %v439 = vmul.f32 -0.5, %v426
    %v440 = vadd.f32 %v439, 1.0
    %v441 = vmul.f32 %v440, %v426
    %v442 = vand.u32 2147483647, %v426
    %vm443 = vcmp.lt.f32.partialorder %v442, 0.0004427343
    %v444 = vsel %vm443, %v441, %v438
    %v445 = vadd.f32 %v413, %v435
    %v446 = vadd.f32 %v414, %v444
    %v447 = vsel %vm415, %v417, %v445
    %v448 = vsel %vm416, %v418, %v446
    %v449 = vadd.f32 %v447, 1e-06
    %v450 = vadd.f32 %v448, 1e-06
    %451 = vst.msk [vmem:[#allocation4] sm:$0xff] %vm410, %v449
    %452 = vst.msk [vmem:[#allocation4 + $0x8] sm:$0xff] %vm410, %v450
    // Predicated region
    $region38: #{tpu_custom_call.1} parent=1 // pred_check
      _
    $region39: #{tpu_custom_call.1} parent=1 // pred_check_branch
      %454 = sbr.rel (0) target = $region41
    $region40: #{tpu_custom_call.1} parent=1 // pred_region
      %s456 = ssub.s32 256, 256
      %457 = vsyncadd [#allocation3], %s456
      %s458 = sshll.u32 [#allocation2], 4
      %s459 = int_to_ptr.vmem [resolvable:$true] %s458
      %464 = dma.vmem_to_hbm [thread:$0]  %s459, 256, %s9, [#allocation3], 128, 128, 8
    $region41: #{tpu_custom_call.1} parent=1 // pred_fallthru
      _
    // Predicated region
    $region42: #{tpu_custom_call.1} parent=1 // pred_check
      _
    $region43: #{tpu_custom_call.1} parent=1 // pred_check_branch
      %466 = sbr.rel (0) target = $region45
    $region44: #{tpu_custom_call.1} parent=1 // pred_region
      %s468 = ssub.s32 256, 256
      %469 = vsyncadd [#allocation5], %s468
      %s470 = sshll.u32 [#allocation4], 4
      %s471 = int_to_ptr.vmem [resolvable:$true] %s470
      %476 = dma.vmem_to_hbm [thread:$0]  %s471, 256, %s10, [#allocation5], 128, 128, 8
    $region45: #{tpu_custom_call.1} parent=1 // pred_fallthru
      _
    // Predicated region
    $region46: #{tpu_custom_call.1} parent=1 // pred_check
      _
    $region47: #{tpu_custom_call.1} parent=1 // pred_check_branch
      %478 = sbr.rel (0) target = $region49
    $region48: #{tpu_custom_call.1} parent=1 // pred_region
      %479 = dma.done [#allocation3], 256
    $region49: #{tpu_custom_call.1} parent=1 // pred_fallthru
      _
    // Predicated region
    $region50: #{tpu_custom_call.1} parent=1 // pred_check
      _
    $region51: #{tpu_custom_call.1} parent=1 // pred_check_branch
      %481 = sbr.rel (0) target = $region53
    $region52: #{tpu_custom_call.1} parent=1 // pred_region
      %482 = dma.done [#allocation5], 256
    $region53: #{tpu_custom_call.1} parent=1 // pred_fallthru
      _
    %483 = vsyncpa [#allocation3], 1
    %484 = vsyncpa [#allocation5], 1

// kernel: tpu_custom_call.1
$region0: #{tpu_custom_call.1}
  #allocation0 [shape = 'u32[]', space=smem, size = 0x4, offset = 0x4, fixed_abs, tag = 'smem constant byte address 0x4 - core index']
  #allocation1 [shape = 'u32[144,128]{1,0:T(1,128)}', space=vmem, size = 0x12000, scoped, tag = 'internal scratch']
  %s0 = inlined_call_operand.vmem [shape: f32[16,32], index: 0, kind: input, shape index: {}]
  %s1 = inlined_call_operand.vmem [shape: f32[32,64], index: 1, kind: input, shape index: {}]
  %s2 = inlined_call_operand.vmem [shape: f32[1,64], index: 2, kind: input, shape index: {}]
  %s3 = inlined_call_operand.vmem [shape: f32[64,32], index: 3, kind: input, shape index: {}]
  %s4 = inlined_call_operand.vmem [shape: f32[1,32], index: 4, kind: input, shape index: {}]
  %s5 = inlined_call_operand.vmem [shape: f32[32,16], index: 5, kind: input, shape index: {}]
  %s6 = inlined_call_operand.vmem [shape: f32[1,16], index: 6, kind: input, shape index: {}]
  %s7 = inlined_call_operand.vmem [shape: f32[32,16], index: 7, kind: input, shape index: {}]
  %s8 = inlined_call_operand.vmem [shape: f32[1,16], index: 8, kind: input, shape index: {}]
  %s9 = inlined_call_operand.hbm [shape: f32[16,16], index: 9, kind: output, shape index: {0}]
  %s10 = inlined_call_operand.hbm [shape: f32[16,16], index: 10, kind: output, shape index: {1}]
  %11 = xla_tuple %s9, %s10
  %s12 = sld [smem:[#allocation0]]
  $region54: #{tpu_custom_call.1} parent=0
    _
  %s14 = ssub.s32 1, %s12
  %s15 = scalar_select 0, %s14, %s12
  $region1: #{tpu_custom_call.1} parent=0
    #allocation2 [shape = 'u8[8192]{0}', space=vmem, size = 0x2000, scoped, tag = 'output window, operand 0, single buffered']
    #allocation3 [shape = 's32[1]{0}', space=sflag, size = 0x4, scoped, tag = 'scoped memory for tpu_custom_call.1']
    #allocation4 [shape = 'u8[8192]{0}', space=vmem, size = 0x2000, scoped, tag = 'output window, operand 1, single buffered']
    #allocation5 [shape = 's32[1]{0}', space=sflag, size = 0x4, scoped, tag = 'scoped memory for tpu_custom_call.1']
    %16 = vsyncpa [#allocation3], 0
    %17 = vsyncpa [#allocation5], 0
    // Predicated region
    $region2: #{tpu_custom_call.1} parent=1 // pred_check
      _
    $region3: #{tpu_custom_call.1} parent=1 // pred_check_branch
      %19 = sbr.rel (0) target = $region5
    $region4: #{tpu_custom_call.1} parent=1 // pred_region
      _
    $region5: #{tpu_custom_call.1} parent=1 // pred_fallthru
      _
    // Predicated region
    $region6: #{tpu_custom_call.1} parent=1 // pred_check
      _
    $region7: #{tpu_custom_call.1} parent=1 // pred_check_branch
      %21 = sbr.rel (0) target = $region9
    $region8: #{tpu_custom_call.1} parent=1 // pred_region
      _
    $region9: #{tpu_custom_call.1} parent=1 // pred_fallthru
      _
    // Predicated region
    $region10: #{tpu_custom_call.1} parent=1 // pred_check
      _
    $region11: #{tpu_custom_call.1} parent=1 // pred_check_branch
      %23 = sbr.rel (0) target = $region13
    $region12: #{tpu_custom_call.1} parent=1 // pred_region
      _
    $region13: #{tpu_custom_call.1} parent=1 // pred_fallthru
      _
    // Predicated region
    $region14: #{tpu_custom_call.1} parent=1 // pred_check
      _
    $region15: #{tpu_custom_call.1} parent=1 // pred_check_branch
      %25 = sbr.rel (0) target = $region17
    $region16: #{tpu_custom_call.1} parent=1 // pred_region
      _
    $region17: #{tpu_custom_call.1} parent=1 // pred_fallthru
      _
    // Predicated region
    $region18: #{tpu_custom_call.1} parent=1 // pred_check
      _
    $region19: #{tpu_custom_call.1} parent=1 // pred_check_branch
      %27 = sbr.rel (0) target = $region21
    $region20: #{tpu_custom_call.1} parent=1 // pred_region
      _
    $region21: #{tpu_custom_call.1} parent=1 // pred_fallthru
      _
    // Predicated region
    $region22: #{tpu_custom_call.1} parent=1 // pred_check
      _
    $region23: #{tpu_custom_call.1} parent=1 // pred_check_branch
      %29 = sbr.rel (0) target = $region25
    $region24: #{tpu_custom_call.1} parent=1 // pred_region
      _
    $region25: #{tpu_custom_call.1} parent=1 // pred_fallthru
      _
    // Predicated region
    $region26: #{tpu_custom_call.1} parent=1 // pred_check
      _
    $region27: #{tpu_custom_call.1} parent=1 // pred_check_branch
      %31 = sbr.rel (0) target = $region29
    $region28: #{tpu_custom_call.1} parent=1 // pred_region
      _
    $region29: #{tpu_custom_call.1} parent=1 // pred_fallthru
      _
    // Predicated region
    $region30: #{tpu_custom_call.1} parent=1 // pred_check
      _
    $region31: #{tpu_custom_call.1} parent=1 // pred_check_branch
      %33 = sbr.rel (0) target = $region33
    $region32: #{tpu_custom_call.1} parent=1 // pred_region
      _
    $region33: #{tpu_custom_call.1} parent=1 // pred_fallthru
      _
    // Predicated region
    $region34: #{tpu_custom_call.1} parent=1 // pred_check
      _
    $region35: #{tpu_custom_call.1} parent=1 // pred_check_branch
      %35 = sbr.rel (0) target = $region37
    $region36: #{tpu_custom_call.1} parent=1 // pred_region
      _
    $region37: #{tpu_custom_call.1} parent=1 // pred_fallthru
      _
    %v36 = vld [vmem:[%s0] sm:$0xff]
    %v37 = vld [vmem:[%s0 + $0x8] sm:$0xff]
    %v38 = vld [vmem:[%s1] sm:$0xff]
    %v39 = vld [vmem:[%s1 + $0x8] sm:$0xff]
    %v40 = vld [vmem:[%s1 + $0x10] sm:$0xff]
    %v41 = vld [vmem:[%s1 + $0x18] sm:$0xff]
    %v42 = vld [vmem:[%s2] sm:$0x1]
    %v44 = vlaneseq
    %v45 = vshrl.u32 %v44, 7
    %v46 = vsub.s32 0, %v45
    %v47 = vrot.slane %v42, %v46
    %vm49 = vcmask 261120
    %v51 = vsel %vm49, %v36, 0
    %v54 = vsel %vm49, %v37, 0
    %56 = vmatprep.subr.mxu0 0.0
    %57 = vmatpush1.msra.mxu0 %v38
    %58 = vmatprep.subr.mxu0 0.0
    %59 = vmatpush1.msra.mxu0 %v39
    %60 = vmatprep.subr.mxu0 0.0
    %61 = vmatpush1.msra.mxu0 %v40
    %62 = vmatprep.subr.mxu0 0.0
    %63 = vmatpush1.msra.mxu0 %v41
    %64 = vmatprep.subr.mxu0 0.0
    %65 = vmatpush1.msra.mxu0 0.0
    %66 = vmatprep.subr.mxu0 0.0
    %67 = vmatpush1.msra.mxu0 0.0
    %68 = vmatprep.subr.mxu0 0.0
    %69 = vmatpush1.msra.mxu0 0.0
    %70 = vmatprep.subr.mxu0 0.0
    %71 = vmatpush1.msra.mxu0 0.0
    %72 = vmatprep.subr.mxu0 0.0
    %73 = vmatpush1.msra.mxu0 0.0
    %74 = vmatprep.subr.mxu0 0.0
    %75 = vmatpush1.msra.mxu0 0.0
    %76 = vmatprep.subr.mxu0 0.0
    %77 = vmatpush1.msra.mxu0 0.0
    %78 = vmatprep.subr.mxu0 0.0
    %79 = vmatpush1.msra.mxu0 0.0
    %80 = vmatprep.subr.mxu0 0.0
    %81 = vmatpush1.msra.mxu0 0.0
    %82 = vmatprep.subr.mxu0 0.0
    %83 = vmatpush1.msra.mxu0 0.0
    %84 = vmatprep.subr.mxu0 0.0
    %85 = vmatpush1.msra.mxu0 0.0
    %86 = vmatprep.subr.mxu0 0.0
    %87 = vmatpush1.msra.mxu0 0.0
    %88 = vmatprep.subr.mxu0 0.0
    %89 = vmatpush1.msra.mxu0 0.0
    %90 = vmatprep.subr.mxu0 0.0
    %91 = vmatpush1.msra.mxu0 0.0
    %92 = vmatprep.subr.mxu0 0.0
    %93 = vmatpush1.msra.mxu0 0.0
    %94 = vmatprep.subr.mxu0 0.0
    %95 = vmatpush1.msra.mxu0 0.0
    %96 = vmatprep.subr.mxu0 0.0
    %97 = vmatpush1.msra.mxu0 0.0
    %98 = vmatprep.subr.mxu0 0.0
    %99 = vmatpush1.msra.mxu0 0.0
    %100 = vmatprep.subr.mxu0 0.0
    %101 = vmatpush1.msra.mxu0 0.0
    %102 = vmatprep.subr.mxu0 0.0
    %103 = vmatpush1.msra.mxu0 0.0
    %104 = vmatprep.subr.mxu0 0.0
    %105 = vmatpush1.msra.mxu0 0.0
    %106 = vmatprep.subr.mxu0 0.0
    %107 = vmatpush1.msra.mxu0 0.0
    %108 = vmatprep.subr.mxu0 0.0
    %109 = vmatpush1.msra.mxu0 0.0
    %110 = vmatprep.subr.mxu0 0.0
    %111 = vmatpush1.msra.mxu0 0.0
    %112 = vmatprep.subr.mxu0 0.0
    %113 = vmatpush1.msra.mxu0 0.0
    %114 = vmatprep.subr.mxu0 0.0
    %115 = vmatpush1.msra.mxu0 0.0
    %116 = vmatprep.subr.mxu0 0.0
    %117 = vmatpush1.msra.mxu0 0.0
    %118 = vmatprep.subr.mxu0 0.0
    %119 = vmatpush1.msra.mxu0 0.0
    %120 = vmatprep.mubr.f32.mxu0 0.0
    %121 = vmatmul.mubr.f32.gmra.mrb[0].mxu0 %v51
    %v122 = vpop.f32.mrb[0].mxu0
    %v123 = vadd.f32 %v47, %v122
    %v124 = vpop.f32.mrb[0].mxu0
    %125 = vmatprep.mubr.f32.mxu0 0.0
    %126 = vmatmul.mubr.f32.gmra.mrb[0].mxu0 %v54
    %v127 = vpop.f32.mrb[0].mxu0
    %v128 = vadd.f32 %v47, %v127
    %v129 = vpop.f32.mrb[0].mxu0
    %130 = vdwg.mxu0
    %v131 = vmax.f32 %v123, 0.0
    %v132 = vmax.f32 %v128, 0.0
    %v133 = vld [vmem:[%s3] sm:$0xff]
    %v134 = vld [vmem:[%s3 + $0x8] sm:$0xff]
    %v135 = vld [vmem:[%s3 + $0x10] sm:$0xff]
    %v136 = vld [vmem:[%s3 + $0x18] sm:$0xff]
    %v137 = vld [vmem:[%s3 + $0x20] sm:$0xff]
    %v138 = vld [vmem:[%s3 + $0x28] sm:$0xff]
    %v139 = vld [vmem:[%s3 + $0x30] sm:$0xff]
    %v140 = vld [vmem:[%s3 + $0x38] sm:$0xff]
    %v141 = vld [vmem:[%s4] sm:$0x1]
    %v143 = vlaneseq
    %v144 = vshrl.u32 %v143, 7
    %v145 = vsub.s32 0, %v144
    %v146 = vrot.slane %v141, %v145
    %vm148 = vcmask 523264
    %v150 = vsel %vm148, %v131, 0
    %v153 = vsel %vm148, %v132, 0
    %155 = vmatprep.subr.mxu0 0.0
    %156 = vmatpush1.msra.mxu0 %v133
    %157 = vmatprep.subr.mxu0 0.0
    %158 = vmatpush1.msra.mxu0 %v134
    %159 = vmatprep.subr.mxu0 0.0
    %160 = vmatpush1.msra.mxu0 %v135
    %161 = vmatprep.subr.mxu0 0.0
    %162 = vmatpush1.msra.mxu0 %v136
    %163 = vmatprep.subr.mxu0 0.0
    %164 = vmatpush1.msra.mxu0 %v137
    %165 = vmatprep.subr.mxu0 0.0
    %166 = vmatpush1.msra.mxu0 %v138
    %167 = vmatprep.subr.mxu0 0.0
    %168 = vmatpush1.msra.mxu0 %v139
    %169 = vmatprep.subr.mxu0 0.0
    %170 = vmatpush1.msra.mxu0 %v140
    %171 = vmatprep.subr.mxu0 0.0
    %172 = vmatpush1.msra.mxu0 0.0
    %173 = vmatprep.subr.mxu0 0.0
    %174 = vmatpush1.msra.mxu0 0.0
    %175 = vmatprep.subr.mxu0 0.0
    %176 = vmatpush1.msra.mxu0 0.0
    %177 = vmatprep.subr.mxu0 0.0
    %178 = vmatpush1.msra.mxu0 0.0
    %179 = vmatprep.subr.mxu0 0.0
    %180 = vmatpush1.msra.mxu0 0.0
    %181 = vmatprep.subr.mxu0 0.0
    %182 = vmatpush1.msra.mxu0 0.0
    %183 = vmatprep.subr.mxu0 0.0
    %184 = vmatpush1.msra.mxu0 0.0
    %185 = vmatprep.subr.mxu0 0.0
    %186 = vmatpush1.msra.mxu0 0.0
    %187 = vmatprep.subr.mxu0 0.0
    %188 = vmatpush1.msra.mxu0 0.0
    %189 = vmatprep.subr.mxu0 0.0
    %190 = vmatpush1.msra.mxu0 0.0
    %191 = vmatprep.subr.mxu0 0.0
    %192 = vmatpush1.msra.mxu0 0.0
    %193 = vmatprep.subr.mxu0 0.0
    %194 = vmatpush1.msra.mxu0 0.0
    %195 = vmatprep.subr.mxu0 0.0
    %196 = vmatpush1.msra.mxu0 0.0
    %197 = vmatprep.subr.mxu0 0.0
    %198 = vmatpush1.msra.mxu0 0.0
    %199 = vmatprep.subr.mxu0 0.0
    %200 = vmatpush1.msra.mxu0 0.0
    %201 = vmatprep.subr.mxu0 0.0
    %202 = vmatpush1.msra.mxu0 0.0
    %203 = vmatprep.subr.mxu0 0.0
    %204 = vmatpush1.msra.mxu0 0.0
    %205 = vmatprep.subr.mxu0 0.0
    %206 = vmatpush1.msra.mxu0 0.0
    %207 = vmatprep.subr.mxu0 0.0
    %208 = vmatpush1.msra.mxu0 0.0
    %209 = vmatprep.subr.mxu0 0.0
    %210 = vmatpush1.msra.mxu0 0.0
    %211 = vmatprep.subr.mxu0 0.0
    %212 = vmatpush1.msra.mxu0 0.0
    %213 = vmatprep.subr.mxu0 0.0
    %214 = vmatpush1.msra.mxu0 0.0
    %215 = vmatprep.subr.mxu0 0.0
    %216 = vmatpush1.msra.mxu0 0.0
    %217 = vmatprep.subr.mxu0 0.0
    %218 = vmatpush1.msra.mxu0 0.0
    %219 = vmatprep.mubr.f32.mxu0 0.0
    %220 = vmatmul.mubr.f32.gmra.mrb[0].mxu0 %v150
    %v221 = vpop.f32.mrb[0].mxu0
    %v222 = vadd.f32 %v146, %v221
    %v223 = vpop.f32.mrb[0].mxu0
    %224 = vmatprep.mubr.f32.mxu0 0.0
    %225 = vmatmul.mubr.f32.gmra.mrb[0].mxu0 %v153
    %v226 = vpop.f32.mrb[0].mxu0
    %v227 = vadd.f32 %v146, %v226
    %v228 = vpop.f32.mrb[0].mxu0
    %229 = vdwg.mxu0
    %v230 = vmax.f32 %v222, 0.0
    %v231 = vmax.f32 %v227, 0.0
    %v232 = vld [vmem:[%s5] sm:$0xff]
    %v233 = vld [vmem:[%s5 + $0x8] sm:$0xff]
    %v234 = vld [vmem:[%s5 + $0x10] sm:$0xff]
    %v235 = vld [vmem:[%s5 + $0x18] sm:$0xff]
    %v236 = vld [vmem:[%s6] sm:$0x1]
    %v238 = vlaneseq
    %v239 = vshrl.u32 %v238, 7
    %v240 = vsub.s32 0, %v239
    %v241 = vrot.slane %v236, %v240
    %v244 = vsel %vm49, %v230, 0
    %v247 = vsel %vm49, %v231, 0
    %249 = vmatprep.subr.mxu0 0.0
    %250 = vmatpush1.msra.mxu0 %v232
    %251 = vmatprep.subr.mxu0 0.0
    %252 = vmatpush1.msra.mxu0 %v233
    %253 = vmatprep.subr.mxu0 0.0
    %254 = vmatpush1.msra.mxu0 %v234
    %255 = vmatprep.subr.mxu0 0.0
    %256 = vmatpush1.msra.mxu0 %v235
    %257 = vmatprep.subr.mxu0 0.0
    %258 = vmatpush1.msra.mxu0 0.0
    %259 = vmatprep.subr.mxu0 0.0
    %260 = vmatpush1.msra.mxu0 0.0
    %261 = vmatprep.subr.mxu0 0.0
    %262 = vmatpush1.msra.mxu0 0.0
    %263 = vmatprep.subr.mxu0 0.0
    %264 = vmatpush1.msra.mxu0 0.0
    %265 = vmatprep.subr.mxu0 0.0
    %266 = vmatpush1.msra.mxu0 0.0
    %267 = vmatprep.subr.mxu0 0.0
    %268 = vmatpush1.msra.mxu0 0.0
    %269 = vmatprep.subr.mxu0 0.0
    %270 = vmatpush1.msra.mxu0 0.0
    %271 = vmatprep.subr.mxu0 0.0
    %272 = vmatpush1.msra.mxu0 0.0
    %273 = vmatprep.subr.mxu0 0.0
    %274 = vmatpush1.msra.mxu0 0.0
    %275 = vmatprep.subr.mxu0 0.0
    %276 = vmatpush1.msra.mxu0 0.0
    %277 = vmatprep.subr.mxu0 0.0
    %278 = vmatpush1.msra.mxu0 0.0
    %279 = vmatprep.subr.mxu0 0.0
    %280 = vmatpush1.msra.mxu0 0.0
    %281 = vmatprep.subr.mxu0 0.0
    %282 = vmatpush1.msra.mxu0 0.0
    %283 = vmatprep.subr.mxu0 0.0
    %284 = vmatpush1.msra.mxu0 0.0
    %285 = vmatprep.subr.mxu0 0.0
    %286 = vmatpush1.msra.mxu0 0.0
    %287 = vmatprep.subr.mxu0 0.0
    %288 = vmatpush1.msra.mxu0 0.0
    %289 = vmatprep.subr.mxu0 0.0
    %290 = vmatpush1.msra.mxu0 0.0
    %291 = vmatprep.subr.mxu0 0.0
    %292 = vmatpush1.msra.mxu0 0.0
    %293 = vmatprep.subr.mxu0 0.0
    %294 = vmatpush1.msra.mxu0 0.0
    %295 = vmatprep.subr.mxu0 0.0
    %296 = vmatpush1.msra.mxu0 0.0
    %297 = vmatprep.subr.mxu0 0.0
    %298 = vmatpush1.msra.mxu0 0.0
    %299 = vmatprep.subr.mxu0 0.0
    %300 = vmatpush1.msra.mxu0 0.0
    %301 = vmatprep.subr.mxu0 0.0
    %302 = vmatpush1.msra.mxu0 0.0
    %303 = vmatprep.subr.mxu0 0.0
    %304 = vmatpush1.msra.mxu0 0.0
    %305 = vmatprep.subr.mxu0 0.0
    %306 = vmatpush1.msra.mxu0 0.0
    %307 = vmatprep.subr.mxu0 0.0
    %308 = vmatpush1.msra.mxu0 0.0
    %309 = vmatprep.subr.mxu0 0.0
    %310 = vmatpush1.msra.mxu0 0.0
    %311 = vmatprep.subr.mxu0 0.0
    %312 = vmatpush1.msra.mxu0 0.0
    %313 = vmatprep.mubr.f32.mxu0 0.0
    %314 = vmatmul.mubr.f32.gmra.mrb[0].mxu0 %v244
    %v315 = vpop.f32.mrb[0].mxu0
    %v316 = vadd.f32 %v241, %v315
    %v317 = vpop.f32.mrb[0].mxu0
    %318 = vmatprep.mubr.f32.mxu0 0.0
    %319 = vmatmul.mubr.f32.gmra.mrb[0].mxu0 %v247
    %v320 = vpop.f32.mrb[0].mxu0
    %v321 = vadd.f32 %v241, %v320
    %v322 = vpop.f32.mrb[0].mxu0
    %323 = vdwg.mxu0
    %v324 = vld [vmem:[%s7] sm:$0xff]
    %v325 = vld [vmem:[%s7 + $0x8] sm:$0xff]
    %v326 = vld [vmem:[%s7 + $0x10] sm:$0xff]
    %v327 = vld [vmem:[%s7 + $0x18] sm:$0xff]
    %v328 = vld [vmem:[%s8] sm:$0x1]
    %v330 = vlaneseq
    %v331 = vshrl.u32 %v330, 7
    %v332 = vsub.s32 0, %v331
    %v333 = vrot.slane %v328, %v332
    %335 = vmatprep.subr.mxu0 0.0
    %336 = vmatpush1.msra.mxu0 %v324
    %337 = vmatprep.subr.mxu0 0.0
    %338 = vmatpush1.msra.mxu0 %v325
    %339 = vmatprep.subr.mxu0 0.0
    %340 = vmatpush1.msra.mxu0 %v326
    %341 = vmatprep.subr.mxu0 0.0
    %342 = vmatpush1.msra.mxu0 %v327
    %343 = vmatprep.subr.mxu0 0.0
    %344 = vmatpush1.msra.mxu0 0.0
    %345 = vmatprep.subr.mxu0 0.0
    %346 = vmatpush1.msra.mxu0 0.0
    %347 = vmatprep.subr.mxu0 0.0
    %348 = vmatpush1.msra.mxu0 0.0
    %349 = vmatprep.subr.mxu0 0.0
    %350 = vmatpush1.msra.mxu0 0.0
    %351 = vmatprep.subr.mxu0 0.0
    %352 = vmatpush1.msra.mxu0 0.0
    %353 = vmatprep.subr.mxu0 0.0
    %354 = vmatpush1.msra.mxu0 0.0
    %355 = vmatprep.subr.mxu0 0.0
    %356 = vmatpush1.msra.mxu0 0.0
    %357 = vmatprep.subr.mxu0 0.0
    %358 = vmatpush1.msra.mxu0 0.0
    %359 = vmatprep.subr.mxu0 0.0
    %360 = vmatpush1.msra.mxu0 0.0
    %361 = vmatprep.subr.mxu0 0.0
    %362 = vmatpush1.msra.mxu0 0.0
    %363 = vmatprep.subr.mxu0 0.0
    %364 = vmatpush1.msra.mxu0 0.0
    %365 = vmatprep.subr.mxu0 0.0
    %366 = vmatpush1.msra.mxu0 0.0
    %367 = vmatprep.subr.mxu0 0.0
    %368 = vmatpush1.msra.mxu0 0.0
    %369 = vmatprep.subr.mxu0 0.0
    %370 = vmatpush1.msra.mxu0 0.0
    %371 = vmatprep.subr.mxu0 0.0
    %372 = vmatpush1.msra.mxu0 0.0
    %373 = vmatprep.subr.mxu0 0.0
    %374 = vmatpush1.msra.mxu0 0.0
    %375 = vmatprep.subr.mxu0 0.0
    %376 = vmatpush1.msra.mxu0 0.0
    %377 = vmatprep.subr.mxu0 0.0
    %378 = vmatpush1.msra.mxu0 0.0
    %379 = vmatprep.subr.mxu0 0.0
    %380 = vmatpush1.msra.mxu0 0.0
    %381 = vmatprep.subr.mxu0 0.0
    %382 = vmatpush1.msra.mxu0 0.0
    %383 = vmatprep.subr.mxu0 0.0
    %384 = vmatpush1.msra.mxu0 0.0
    %385 = vmatprep.subr.mxu0 0.0
    %386 = vmatpush1.msra.mxu0 0.0
    %387 = vmatprep.subr.mxu0 0.0
    %388 = vmatpush1.msra.mxu0 0.0
    %389 = vmatprep.subr.mxu0 0.0
    %390 = vmatpush1.msra.mxu0 0.0
    %391 = vmatprep.subr.mxu0 0.0
    %392 = vmatpush1.msra.mxu0 0.0
    %393 = vmatprep.subr.mxu0 0.0
    %394 = vmatpush1.msra.mxu0 0.0
    %395 = vmatprep.subr.mxu0 0.0
    %396 = vmatpush1.msra.mxu0 0.0
    %397 = vmatprep.subr.mxu0 0.0
    %398 = vmatpush1.msra.mxu0 0.0
    %399 = vmatprep.mubr.f32.mxu0 0.0
    %400 = vmatmul.mubr.f32.gmra.mrb[0].mxu0 %v244
    %v401 = vpop.f32.mrb[0].mxu0
    %v402 = vadd.f32 %v333, %v401
    %v403 = vpop.f32.mrb[0].mxu0
    %404 = vmatprep.mubr.f32.mxu0 0.0
    %405 = vmatmul.mubr.f32.gmra.mrb[0].mxu0 %v247
    %v406 = vpop.f32.mrb[0].mxu0
    %v407 = vadd.f32 %v333, %v406
    %v408 = vpop.f32.mrb[0].mxu0
    %409 = vdwg.mxu0
    %vm410 = vcmask 130048
    %411 = vst.msk [vmem:[#allocation2] sm:$0xff] %vm410, %v316
    %412 = vst.msk [vmem:[#allocation2 + $0x8] sm:$0xff] %vm410, %v321
    %v413 = vmax.f32 %v402, 0.0
    %v414 = vmax.f32 %v407, 0.0
    %vm415 = vcmp.ne.f32.partialorder %v402, %v402
    %vm416 = vcmp.ne.f32.partialorder %v407, %v407
    %v417 = vadd.f32 %v402, 0.0
    %v418 = vadd.f32 %v407, 0.0
    %v419 = vand.u32 2147483647, %v402
    %v420 = vand.u32 2147483647, %v407
    %v421 = vsub.f32 0.0, %v419
    %v422 = vsub.f32 0.0, %v420
    %v423 = vmul.f32 %v421, 1.442695
    %v424 = vpow.pop %v423
    %v425 = vmul.f32 %v422, 1.442695
    %v426 = vpow.pop %v425
    %v427 = vadd.f32 %v424, 1.0
    %v428 = vlog2.pop %v427
    %v429 = vmul.f32 %v428, 0.6931472
    %v430 = vmul.f32 -0.5, %v424
    %v431 = vadd.f32 %v430, 1.0
    %v432 = vmul.f32 %v431, %v424
    %v433 = vand.u32 2147483647, %v424
    %vm434 = vcmp.lt.f32.partialorder %v433, 0.0004427343
    %v435 = vsel %vm434, %v432, %v429
    %v436 = vadd.f32 %v426, 1.0
    %v437 = vlog2.pop %v436
    %v438 = vmul.f32 %v437, 0.6931472
    %v439 = vmul.f32 -0.5, %v426
    %v440 = vadd.f32 %v439, 1.0
    %v441 = vmul.f32 %v440, %v426
    %v442 = vand.u32 2147483647, %v426
    %vm443 = vcmp.lt.f32.partialorder %v442, 0.0004427343
    %v444 = vsel %vm443, %v441, %v438
    %v445 = vadd.f32 %v413, %v435
    %v446 = vadd.f32 %v414, %v444
    %v447 = vsel %vm415, %v417, %v445
    %v448 = vsel %vm416, %v418, %v446
    %v449 = vadd.f32 %v447, 1e-06
    %v450 = vadd.f32 %v448, 1e-06
    %451 = vst.msk [vmem:[#allocation4] sm:$0xff] %vm410, %v449
    %452 = vst.msk [vmem:[#allocation4 + $0x8] sm:$0xff] %vm410, %v450
    // Predicated region
    $region38: #{tpu_custom_call.1} parent=1 // pred_check
      _
    $region39: #{tpu_custom_call.1} parent=1 // pred_check_branch
      %454 = sbr.rel (0) target = $region41
    $region40: #{tpu_custom_call.1} parent=1 // pred_region
      %s456 = ssub.s32 256, 256
      %457 = vsyncadd [#allocation3], %s456
      %s458 = sshll.u32 [#allocation2], 4
      %s459 = int_to_ptr.vmem [resolvable:$true] %s458
      %464 = dma.vmem_to_hbm [thread:$0]  %s459, 256, %s9, [#allocation3], 128, 128, 8
    $region41: #{tpu_custom_call.1} parent=1 // pred_fallthru
      _
    // Predicated region
    $region42: #{tpu_custom_call.1} parent=1 // pred_check
      _
    $region43: #{tpu_custom_call.1} parent=1 // pred_check_branch
      %466 = sbr.rel (0) target = $region45
    $region44: #{tpu_custom_call.1} parent=1 // pred_region
      %s468 = ssub.s32 256, 256
      %469 = vsyncadd [#allocation5], %s468
      %s470 = sshll.u32 [#allocation4], 4
      %s471 = int_to_ptr.vmem [resolvable:$true] %s470
      %476 = dma.vmem_to_hbm [thread:$0]  %s471, 256, %s10, [#allocation5], 128, 128, 8
    $region45: #{tpu_custom_call.1} parent=1 // pred_fallthru
      _
    // Predicated region
    $region46: #{tpu_custom_call.1} parent=1 // pred_check
      _
    $region47: #{tpu_custom_call.1} parent=1 // pred_check_branch
      %478 = sbr.rel (0) target = $region49
    $region48: #{tpu_custom_call.1} parent=1 // pred_region
      %479 = dma.done [#allocation3], 256
    $region49: #{tpu_custom_call.1} parent=1 // pred_fallthru
      _
    // Predicated region
    $region50: #{tpu_custom_call.1} parent=1 // pred_check
      _
    $region51: #{tpu_custom_call.1} parent=1 // pred_check_branch
      %481 = sbr.rel (0) target = $region53
    $region52: #{tpu_custom_call.1} parent=1 // pred_region
      %482 = dma.done [#allocation5], 256
    $region53: #{tpu_custom_call.1} parent=1 // pred_fallthru
      _
    %483 = vsyncpa [#allocation3], 1
    %484 = vsyncpa [#allocation5], 1

</llo_original>
